<compile_context>
chip_gen: v5e
topology: v5e:2x2
jax: 0.10.0
libtpu: 0.0.40
codegen_flags: <defaults>
</compile_context>

<pallas_src>
import functools

import jax
import jax.numpy as jnp
from jax import lax
from jax.experimental import pallas as pl
from jax.experimental.pallas import tpu as pltpu


# ---------------------------------------------------------------------------
# Kernel 1: conv-as-matmul (pixels on lanes) + fused BN partial statistics.
# ---------------------------------------------------------------------------
def conv_stats_kernel(p_ref, w_ref, y_ref, s_ref, ss_ref, *,
                      n_inner, tp, total_px, needs_mask):
    # p_ref  : (1, K, tp)        space-to-depth patches (K x pixels) per batch
    # w_ref  : (C_out, K)        reshaped conv weight (grid-invariant)
    # y_ref  : (1, C_out, tp)    conv output tile (lane-dense pixel dim)
    # s_ref  : (1, 1, C_out, 1)  per-channel sum    (resident over pixel tiles)
    # ss_ref : (1, 1, C_out, 1)  per-channel sum-sq (resident over pixel tiles)
    j = pl.program_id(2)

    @pl.when(j == 0)
    def _():
        s_ref[...] = jnp.zeros_like(s_ref)
        ss_ref[...] = jnp.zeros_like(ss_ref)

    # (C_out, K) @ (K, tp) on the MXU, f32 accumulation.
    y = jnp.dot(w_ref[...], p_ref[0], preferred_element_type=jnp.float32)
    y_ref[0] = y.astype(y_ref.dtype)            # bf16/f32 staging store

    if needs_mask:
        # Last pixel tile is ragged: exclude out-of-range columns from the
        # statistics (their stores are already masked by Pallas).
        tile = pl.program_id(1) * n_inner + j
        valid = total_px - tile * tp
        col = lax.broadcasted_iota(jnp.int32, (1, tp), 1)
        y = jnp.where(col < valid, y, 0.0)

    s_ref[0, 0] += jnp.sum(y, axis=1, keepdims=True)
    ss_ref[0, 0] += jnp.sum(y * y, axis=1, keepdims=True)


# ---------------------------------------------------------------------------
# Kernel 2: BatchNorm normalize (scale/shift pre-folded) + LeakyReLU.
# ---------------------------------------------------------------------------
def bn_lrelu_kernel(y_ref, scale_ref, shift_ref, o_ref, *, negative_slope):
    # y_ref: (1, C_out, tp) staging dtype; scale/shift: (C_out, 1) f32.
    y = y_ref[0].astype(jnp.float32)
    yn = y * scale_ref[...] + shift_ref[...]
    o_ref[0] = jnp.where(yn >= 0, yn, negative_slope * yn).astype(o_ref.dtype)


def _chip_tuning():
    """Pixel-tile cap, per-step block budget and vmem limit by TPU generation."""
    try:
        kind = jax.devices()[0].device_kind.lower()
    except Exception:
        kind = ""
    big_vmem = ("v5" in kind) or ("v6" in kind)      # 128 MiB VMEM chips
    tp_cap = 1024 if big_vmem else 512               # v7x/unknown: 64 MiB -> conservative
    block_budget = (20 if big_vmem else 8) * 1024 * 1024
    vmem_limit = (64 if big_vmem else 32) * 1024 * 1024
    return tp_cap, block_budget, vmem_limit


def down_forward(x_nchw, w_oihw, gamma, beta, *, eps=1e-5, negative_slope=0.1,
                 staging_dtype=jnp.bfloat16):
    N, C_in, H, W = x_nchw.shape
    C_out = w_oihw.shape[0]
    Ho, Wo = H // 2, W // 2
    P = Ho * Wo
    K = 4 * C_in

    if H != 2 * Ho or W != 2 * Wo:                   # PyTorch floors odd H/W
        x_nchw = x_nchw[:, :, :2 * Ho, :2 * Wo]

    # ---- space-to-depth into the transposed (K, pixels) layout -------------
    # (see module-level TODO(synk): kept as an XLA pass; output side needs no
    # transpose because the matmul result is already NCHW-ordered.)
    xt = x_nchw.reshape(N, C_in, Ho, 2, Wo, 2)
    xt = jnp.transpose(xt, (0, 1, 3, 5, 2, 4))       # (N, C_in, kh, kw, Ho, Wo)
    patches = xt.reshape(N, K, P).astype(jnp.float32)
    w_mat = w_oihw.reshape(C_out, K).astype(jnp.float32)   # same (ci, kh, kw) order

    in_bytes = 4
    stage_bytes = jnp.dtype(staging_dtype).itemsize
    out_dtype = x_nchw.dtype
    out_bytes = jnp.dtype(out_dtype).itemsize

    tp_cap, block_budget, vmem_limit = _chip_tuning()

    # ---- pixel-tile size: lane-dense, VMEM-budgeted -------------------------
    def step_bytes(t):     # double-buffered streamed blocks + resident weight
        return (2 * K * t * in_bytes + 2 * C_out * t * stage_bytes
                + 2 * C_out * K * in_bytes)

    tp = tp_cap
    while tp > 128 and step_bytes(tp) > block_budget:
        tp //= 2
    if P <= tp:
        tp = P                                        # full-dim block, always legal
    n_tiles = pl.cdiv(P, tp)
    needs_mask = (P % tp) != 0

    # Split the pixel-tile axis so a dual-core chip (v7x) has a second
    # parallel axis even at N == 1; partial stats are reduced in the finalize.
    S = 2 if (n_tiles >= 2 and n_tiles % 2 == 0) else 1
    n_inner = n_tiles // S

    # ---- kernel 1: conv matmul + fused BN partial statistics ---------------
    kern1 = functools.partial(conv_stats_kernel, n_inner=n_inner, tp=tp,
                              total_px=P, needs_mask=needs_mask)
    y_stage, psum, psumsq = pl.pallas_call(
        kern1,
        out_shape=(
            jax.ShapeDtypeStruct((N, C_out, P), staging_dtype),
            jax.ShapeDtypeStruct((N, S, C_out, 1), jnp.float32),
            jax.ShapeDtypeStruct((N, S, C_out, 1), jnp.float32),
        ),
        grid_spec=pltpu.PrefetchScalarGridSpec(
            num_scalar_prefetch=0,
            grid=(N, S, n_inner),
            in_specs=[
                pl.BlockSpec((1, K, tp), lambda n, s, j: (n, 0, s * n_inner + j)),
                pl.BlockSpec((C_out, K), lambda n, s, j: (0, 0)),
            ],
            out_specs=[
                pl.BlockSpec((1, C_out, tp), lambda n, s, j: (n, 0, s * n_inner + j)),
                pl.BlockSpec((1, 1, C_out, 1), lambda n, s, j: (n, s, 0, 0)),
                pl.BlockSpec((1, 1, C_out, 1), lambda n, s, j: (n, s, 0, 0)),
            ],
        ),
        compiler_params=pltpu.CompilerParams(
            dimension_semantics=("parallel", "parallel", "arbitrary"),
            vmem_limit_bytes=vmem_limit,
        ),
        cost_estimate=pl.CostEstimate(
            flops=int(2 * N * P * K * C_out + 4 * N * P * C_out),
            transcendentals=0,
            bytes_accessed=int(N * K * P * in_bytes + C_out * K * in_bytes
                               + N * C_out * P * stage_bytes
                               + 2 * N * S * C_out * 4),
        ),
    )(patches, w_mat)

    # ---- finalize BN statistics (tiny per-channel arrays, plain JAX) -------
    count = jnp.float32(N * P)
    mean = jnp.sum(psum, axis=(0, 1, 3)) / count      # (C_out,)
    ex2 = jnp.sum(psumsq, axis=(0, 1, 3)) / count
    # Biased variance (PyTorch training-mode normalization).  The clamp guards
    # the E[y^2]-E[y]^2 cancellation; switch to shifted sums if tighter
    # matching is ever required.
    var = jnp.maximum(ex2 - mean * mean, 0.0)
    inv = lax.rsqrt(var + eps)
    g32 = gamma.astype(jnp.float32)
    b32 = beta.astype(jnp.float32)
    scale = (g32 * inv).reshape(C_out, 1)
    shift = (b32 - mean * g32 * inv).reshape(C_out, 1)

    # ---- kernel 2: tiled normalize + LeakyReLU, written unpadded -----------
    out_flat = pl.pallas_call(
        functools.partial(bn_lrelu_kernel, negative_slope=negative_slope),
        out_shape=jax.ShapeDtypeStruct((N, C_out, P), out_dtype),
        grid_spec=pltpu.PrefetchScalarGridSpec(
            num_scalar_prefetch=0,
            grid=(N, n_tiles),
            in_specs=[
                pl.BlockSpec((1, C_out, tp), lambda n, j: (n, 0, j)),
                pl.BlockSpec((C_out, 1), lambda n, j: (0, 0)),
                pl.BlockSpec((C_out, 1), lambda n, j: (0, 0)),
            ],
            out_specs=pl.BlockSpec((1, C_out, tp), lambda n, j: (n, 0, j)),
        ),
        compiler_params=pltpu.CompilerParams(
            dimension_semantics=("parallel", "parallel"),
            vmem_limit_bytes=vmem_limit,
        ),
        cost_estimate=pl.CostEstimate(
            flops=int(4 * N * C_out * P),
            transcendentals=0,
            bytes_accessed=int(N * C_out * P * (stage_bytes + out_bytes)
                               + 2 * C_out * 4),
        ),
    )(y_stage, scale, shift)

    # (N, C_out, P) -> (N, C_out, Ho, Wo) is a free, contiguous reshape.
    return out_flat.reshape(N, C_out, Ho, Wo)


if __name__ == "__main__":
    key = jax.random.PRNGKey(0)
    kx, kw, kg, kb = jax.random.split(key, 4)

    N, C_in, H, W = 2, 4, 16, 16
    C_out = 8

    x = jax.random.normal(kx, (N, C_in, H, W), dtype=jnp.float32)
    w = jax.random.normal(kw, (C_out, C_in, 2, 2), dtype=jnp.float32) * 0.1
    gamma = 1.0 + 0.1 * jax.random.normal(kg, (C_out,), dtype=jnp.float32)
    beta = 0.1 * jax.random.normal(kb, (C_out,), dtype=jnp.float32)

    # pure-JAX reference with the same semantics (training-mode BatchNorm)
    ref = lax.conv_general_dilated(
        x, w, window_strides=(2, 2), padding="VALID",
        dimension_numbers=("NCHW", "OIHW", "NCHW"))
    m = ref.mean(axis=(0, 2, 3), keepdims=True)
    v = ref.var(axis=(0, 2, 3), keepdims=True)
    refn = (ref - m) / jnp.sqrt(v + 1e-5) * gamma.reshape(1, -1, 1, 1) \
        + beta.reshape(1, -1, 1, 1)
    refo = jnp.where(refn >= 0, refn, 0.1 * refn)

    # Default path: bf16 staging of the conv intermediate (stats stay f32).
    out = jax.block_until_ready(down_forward(x, w, gamma, beta))
    assert out.shape == (N, C_out, H // 2, W // 2)
    assert jnp.allclose(out, refo, atol=3e-2, rtol=3e-2), "bf16-staging mismatch"

    # Exact-numerics path: f32 staging.
    out32 = jax.block_until_ready(
        down_forward(x, w, gamma, beta, staging_dtype=jnp.float32))
    assert jnp.allclose(out32, refo, atol=2e-4, rtol=2e-4), "f32 mismatch"

    print("KERNEL_OK")
</pallas_src>

<mosaic_0001>
module attributes {stable_mosaic.version = 11 : i64} {
  func.func @conv_stats_kernel(%arg0: i32, %arg1: i32, %arg2: i32, %arg3: memref<1x16x64xf32, #tpu.memory_space<vmem>>, %arg4: memref<8x16xf32, #tpu.memory_space<vmem>>, %arg5: memref<1x8x64xbf16, #tpu.memory_space<vmem>>, %arg6: memref<1x1x8x1xf32, #tpu.memory_space<vmem>>, %arg7: memref<1x1x8x1xf32, #tpu.memory_space<vmem>>) attributes {dimension_semantics = [#tpu.dimension_semantics<parallel>, #tpu.dimension_semantics<parallel>, #tpu.dimension_semantics<arbitrary>], iteration_bounds = array<i64: 2, 1, 1>, scalar_prefetch = 0 : i64, scratch_operands = 0 : i64, tpu.core_type = #tpu.core_type<tc>, window_params = [{transform_indices = @transform_0, window_bounds = array<i64: 1, 16, 64>}, {pipeline_mode = #tpu.pipeline_mode<synchronous>, transform_indices = @transform_1, window_bounds = array<i64: 8, 16>}, {transform_indices = @transform_2, window_bounds = array<i64: 1, 8, 64>}, {transform_indices = @transform_3, window_bounds = array<i64: 1, 1, 8, 1>}, {transform_indices = @transform_4, window_bounds = array<i64: 1, 1, 8, 1>}]} {
    %c0_i32 = arith.constant 0 : i32
    %0 = arith.cmpi eq, %arg2, %c0_i32 : i32
    %1 = arith.extui %0 : i1 to i32
    %c0_i32_0 = arith.constant 0 : i32
    %2 = arith.cmpi ne, %1, %c0_i32_0 : i32
    scf.if %2 {
      %cst_26 = arith.constant 0.000000e+00 : f32
      %28 = vector.broadcast %cst_26 : f32 to vector<1x1x8x1xf32>
      %c0_27 = arith.constant 0 : index
      %c0_28 = arith.constant 0 : index
      %c0_29 = arith.constant 0 : index
      %c0_30 = arith.constant 0 : index
      %29 = vector.load %arg6[%c0_27, %c0_28, %c0_29, %c0_30] : memref<1x1x8x1xf32, #tpu.memory_space<vmem>>, vector<1x1x8x1xf32>
      tpu.vector_store %arg6[%c0_27, %c0_28, %c0_29, %c0_30], %28 {strides = array<i32>} : memref<1x1x8x1xf32, #tpu.memory_space<vmem>>, vector<1x1x8x1xf32>,
      %cst_31 = arith.constant 0.000000e+00 : f32
      %30 = vector.broadcast %cst_31 : f32 to vector<1x1x8x1xf32>
      %c0_32 = arith.constant 0 : index
      %c0_33 = arith.constant 0 : index
      %c0_34 = arith.constant 0 : index
      %c0_35 = arith.constant 0 : index
      %31 = vector.load %arg7[%c0_32, %c0_33, %c0_34, %c0_35] : memref<1x1x8x1xf32, #tpu.memory_space<vmem>>, vector<1x1x8x1xf32>
      tpu.vector_store %arg7[%c0_32, %c0_33, %c0_34, %c0_35], %30 {strides = array<i32>} : memref<1x1x8x1xf32, #tpu.memory_space<vmem>>, vector<1x1x8x1xf32>,
    } else {
    }
    %c0 = arith.constant 0 : index
    %c0_1 = arith.constant 0 : index
    %3 = vector.load %arg4[%c0, %c0_1] : memref<8x16xf32, #tpu.memory_space<vmem>>, vector<8x16xf32>
    %c0_2 = arith.constant 0 : index
    %c0_3 = arith.constant 0 : index
    %c0_4 = arith.constant 0 : index
    %4 = vector.load %arg3[%c0_2, %c0_3, %c0_4] : memref<1x16x64xf32, #tpu.memory_space<vmem>>, vector<1x16x64xf32>
    %5 = vector.shape_cast %4 : vector<1x16x64xf32> to vector<16x64xf32>
    %cst = arith.constant dense<0.000000e+00> : vector<8x64xf32>
    %6 = tpu.matmul %3, %5, %cst {dimension_numbers = #tpu.dot_dimension_numbers<[1], [0], [0], [1], [0, 0, 1, 1], [], []>} : vector<8x16xf32>, vector<16x64xf32>, vector<8x64xf32> -> vector<8x64xf32>
    %7 = arith.truncf %6 : vector<8x64xf32> to vector<8x64xbf16>
    %c0_5 = arith.constant 0 : index
    %c0_6 = arith.constant 0 : index
    %c0_7 = arith.constant 0 : index
    %8 = vector.load %arg5[%c0_5, %c0_6, %c0_7] : memref<1x8x64xbf16, #tpu.memory_space<vmem>>, vector<1x8x64xbf16>
    %9 = vector.shape_cast %8 : vector<1x8x64xbf16> to vector<8x64xbf16>
    %10 = vector.shape_cast %7 : vector<8x64xbf16> to vector<1x8x64xbf16>
    tpu.vector_store %arg5[%c0_5, %c0_6, %c0_7], %10 {strides = array<i32>} : memref<1x8x64xbf16, #tpu.memory_space<vmem>>, vector<1x8x64xbf16>,
    %c0_8 = arith.constant 0 : index
    %c0_9 = arith.constant 0 : index
    %c0_10 = arith.constant 0 : index
    %c0_11 = arith.constant 0 : index
    %11 = vector.load %arg6[%c0_8, %c0_9, %c0_10, %c0_11] : memref<1x1x8x1xf32, #tpu.memory_space<vmem>>, vector<1x1x8x1xf32>
    %12 = vector.shape_cast %11 : vector<1x1x8x1xf32> to vector<8x1xf32>
    %cst_12 = arith.constant dense<0.000000e+00> : vector<8xf32>
    %13 = vector.multi_reduction <add>, %6, %cst_12 [1] : vector<8x64xf32> to vector<8xf32>
    %14 = vector.shape_cast %13 : vector<8xf32> to vector<8x1xf32>
    %15 = arith.addf %12, %14 : vector<8x1xf32>
    %c0_13 = arith.constant 0 : index
    %c0_14 = arith.constant 0 : index
    %c0_15 = arith.constant 0 : index
    %c0_16 = arith.constant 0 : index
    %16 = vector.load %arg6[%c0_13, %c0_14, %c0_15, %c0_16] : memref<1x1x8x1xf32, #tpu.memory_space<vmem>>, vector<1x1x8x1xf32>
    %17 = vector.shape_cast %16 : vector<1x1x8x1xf32> to vector<8x1xf32>
    %18 = vector.shape_cast %15 : vector<8x1xf32> to vector<1x1x8x1xf32>
    tpu.vector_store %arg6[%c0_13, %c0_14, %c0_15, %c0_16], %18 {strides = array<i32>} : memref<1x1x8x1xf32, #tpu.memory_space<vmem>>, vector<1x1x8x1xf32>,
    %c0_17 = arith.constant 0 : index
    %c0_18 = arith.constant 0 : index
    %c0_19 = arith.constant 0 : index
    %c0_20 = arith.constant 0 : index
    %19 = vector.load %arg7[%c0_17, %c0_18, %c0_19, %c0_20] : memref<1x1x8x1xf32, #tpu.memory_space<vmem>>, vector<1x1x8x1xf32>
    %20 = vector.shape_cast %19 : vector<1x1x8x1xf32> to vector<8x1xf32>
    %21 = arith.mulf %6, %6 : vector<8x64xf32>
    %cst_21 = arith.constant dense<0.000000e+00> : vector<8xf32>
    %22 = vector.multi_reduction <add>, %21, %cst_21 [1] : vector<8x64xf32> to vector<8xf32>
    %23 = vector.shape_cast %22 : vector<8xf32> to vector<8x1xf32>
    %24 = arith.addf %20, %23 : vector<8x1xf32>
    %c0_22 = arith.constant 0 : index
    %c0_23 = arith.constant 0 : index
    %c0_24 = arith.constant 0 : index
    %c0_25 = arith.constant 0 : index
    %25 = vector.load %arg7[%c0_22, %c0_23, %c0_24, %c0_25] : memref<1x1x8x1xf32, #tpu.memory_space<vmem>>, vector<1x1x8x1xf32>
    %26 = vector.shape_cast %25 : vector<1x1x8x1xf32> to vector<8x1xf32>
    %27 = vector.shape_cast %24 : vector<8x1xf32> to vector<1x1x8x1xf32>
    tpu.vector_store %arg7[%c0_22, %c0_23, %c0_24, %c0_25], %27 {strides = array<i32>} : memref<1x1x8x1xf32, #tpu.memory_space<vmem>>, vector<1x1x8x1xf32>,
    return
  }
  func.func @transform_0(%arg0: i32, %arg1: i32, %arg2: i32) -> (i32, i32, i32) {
    %c1_i32 = arith.constant 1 : i32
    %0 = arith.muli %arg1, %c1_i32 : i32
    %1 = arith.addi %0, %arg2 : i32
    %c0_i32 = arith.constant 0 : i32
    %c0_i32_0 = arith.constant 0 : i32
    return %arg0, %c0_i32, %1 : i32, i32, i32
  }
  func.func @transform_1(%arg0: i32, %arg1: i32, %arg2: i32) -> (i32, i32) {
    %c0_i32 = arith.constant 0 : i32
    %c0_i32_0 = arith.constant 0 : i32
    %c0_i32_1 = arith.constant 0 : i32
    return %c0_i32, %c0_i32_0 : i32, i32
  }
  func.func @transform_2(%arg0: i32, %arg1: i32, %arg2: i32) -> (i32, i32, i32) {
    %c1_i32 = arith.constant 1 : i32
    %0 = arith.muli %arg1, %c1_i32 : i32
    %1 = arith.addi %0, %arg2 : i32
    %c0_i32 = arith.constant 0 : i32
    %c0_i32_0 = arith.constant 0 : i32
    return %arg0, %c0_i32, %1 : i32, i32, i32
  }
  func.func @transform_3(%arg0: i32, %arg1: i32, %arg2: i32) -> (i32, i32, i32, i32) {
    %c0_i32 = arith.constant 0 : i32
    %c0_i32_0 = arith.constant 0 : i32
    %c0_i32_1 = arith.constant 0 : i32
    return %arg0, %arg1, %c0_i32, %c0_i32_0 : i32, i32, i32, i32
  }
  func.func @transform_4(%arg0: i32, %arg1: i32, %arg2: i32) -> (i32, i32, i32, i32) {
    %c0_i32 = arith.constant 0 : i32
    %c0_i32_0 = arith.constant 0 : i32
    %c0_i32_1 = arith.constant 0 : i32
    return %arg0, %arg1, %c0_i32, %c0_i32_0 : i32, i32, i32, i32
  }
}

</mosaic_0001>

<llo_original>
// kernel: tpu_custom_call.1
$region0: #{tpu_custom_call.1}
  #allocation0 [shape = 'u32[]', space=smem, size = 0x4, offset = 0x4, fixed_abs, tag = 'smem constant byte address 0x4 - core index']
  #allocation1 [shape = 'u32[72,128]{1,0:T(1,128)}', space=vmem, size = 0x9000, scoped, tag = 'internal scratch']
  %s0 = inlined_call_operand.hbm [shape: f32[2,16,64], index: 0, kind: input, shape index: {}]
  %s1 = inlined_call_operand.hbm [shape: f32[8,16], index: 1, kind: input, shape index: {}]
  %s2 = inlined_call_operand.hbm [shape: bf16[2,8,64], index: 2, kind: output, shape index: {0}]
  %s3 = inlined_call_operand.vmem [shape: f32[2,1,8,1], index: 3, kind: output, shape index: {1}]
  %s4 = inlined_call_operand.vmem [shape: f32[2,1,8,1], index: 4, kind: output, shape index: {2}]
  %5 = xla_tuple %s2, %s3, %s4
  %s6 = sld [smem:[#allocation0]]
  $region69: #{tpu_custom_call.1} parent=0
    _
  %s8 = ssub.s32 1, %s6
  %s9 = scalar_select 0, %s8, %s6
  $region1: #{tpu_custom_call.1} parent=0
    #allocation2 [shape = 'u8[16384]{0}', space=vmem, size = 0x4000, scoped, tag = 'input window, operand 0']
    #allocation3 [shape = 's32[2]{0}', space=sflag, size = 0x8, scoped, tag = 'scoped memory for tpu_custom_call.1']
    #allocation4 [shape = 's32[2]{0}', space=sflag, size = 0x8, scoped, tag = 'scoped memory for tpu_custom_call.1']
    #allocation5 [shape = 'u8[4096]{0}', space=vmem, size = 0x1000, scoped, tag = 'input window, operand 1, single buffered']
    #allocation6 [shape = 's32[1]{0}', space=sflag, size = 0x4, scoped, tag = 'scoped memory for tpu_custom_call.1']
    #allocation7 [shape = 'u8[4096]{0}', space=vmem, size = 0x1000, scoped, tag = 'output window, operand 0']
    %10 = vsyncpa [#allocation3], 0
    %s11 = scalar_lea.sflag [#allocation3], 1
    %12 = vsyncpa %s11, 0
    %13 = vsyncpa [#allocation6], 0
    %14 = vsyncpa [#allocation4], 0
    %s15 = scalar_lea.sflag [#allocation4], 1
    %16 = vsyncpa %s15, 0
    loop: start=0, step=1, limit=4
    $region2: #{tpu_custom_call.1} parent=1 // loop_pre_header
      _
    $region3: #{tpu_custom_call.1} parent=1 // loop_header
      %s18 = sphi 0, %s22
      %p19 = scmp.ge.s32.totalorder %s18, 4
      %s25 = sphi 0, %s44
      %s26 = sphi 0, %s40
      %s27 = sphi 0, %s36
      %s28 = sphi 0, %s25
      %s29 = sphi 0, %s26
      %s30 = sphi 0, %s27
      %s31 = sphi 0, %s28
      %s32 = sphi 0, %s29
      %s33 = sphi 0, %s30
      %s51 = sphi 0, %s53
      %s54 = sphi 0, %s51
      %s55 = sphi 0, %s54
      %s71 = sphi 0, %s55
      %s75 = sphi 0, %s75
      %s77 = sphi 0, %s75
      %s78 = sphi 0, %s77
      %s92 = sphi 0, %s78
      %s102 = sphi 0, %s104
      %s105 = sphi 0, %s102
      %s106 = sphi 0, %s105
      %s122 = sphi 0, %s106
      %s130 = sphi 0, %s132
      %s133 = sphi 0, %s130
      %s134 = sphi 0, %s133
      %s150 = sphi 0, %s134
      %s158 = sphi 0, %s160
      %s161 = sphi 0, %s158
      %s162 = sphi 0, %s161
      %s178 = sphi 0, %s162
    $region4: #{tpu_custom_call.1} parent=1 // loop_header_branch
      %21 = sbr.rel (%p19) target = $region8
    $region5: #{tpu_custom_call.1} parent=1 // loop_body
      %s23 = ssub.s32 %s18, 1
      %s24 = ssub.s32 %s18, 2
      %s34 = sadd.s32 1, %s27
      %p35 = scmp.ge.s32.totalorder %s34, 1
      %s36 = scalar_select %p35, 0, %s34
      %s37 = sadd.s32 1, %s26
      %s38 = scalar_select %p35, %s37, %s26
      %p39 = scmp.ge.s32.totalorder %s38, 1
      %s40 = scalar_select %p39, 0, %s38
      %s41 = sadd.s32 1, %s25
      %s42 = scalar_select %p39, %s41, %s25
      %p43 = scmp.ge.s32.totalorder %s42, 2
      %s44 = scalar_select %p43, 0, %s42
      %s45 = sadd.s32 %s26, %s27
      %s46 = sadd.s32 %s40, %s36
      %s47 = ssub.s32 %s25, %s44
      %s48 = ssub.s32 %s45, %s46
      %s49 = sor.u32 %s47, %s48
      %p50 = scmp.eq.s32.totalorder %s49, 0
      %s52 = sadd.s32 %s51, 1
      %s53 = scalar_select %p50, %s51, %s52
      %p56 = pneg %p50
      %p57 = scmp.eq.s32.totalorder %s18, 1
      %p58 = por %p56, %p57
      %p59 = scmp.ne.s32.totalorder %s51, %s54
      %p60 = scmp.eq.s32.totalorder %s18, 0
      %p61 = por %p59, %p60
      %p62 = scmp.ne.s32.totalorder %s51, %s54
      %p63 = scmp.eq.s32.totalorder %s23, 1
      %p64 = por %p62, %p63
      %p65 = scmp.ne.s32.totalorder %s54, %s55
      %p66 = scmp.eq.s32.totalorder %s23, 0
      %p67 = por %p65, %p66
      %p68 = scmp.ne.s32.totalorder %s54, %s55
      %p69 = scmp.eq.s32.totalorder %s24, 1
      %p70 = por %p68, %p69
      %p72 = scmp.ne.s32.totalorder %s55, %s71
      %p73 = scmp.eq.s32.totalorder %s24, 0
      %p74 = por %p72, %p73
      %s76 = sadd.s32 %s75, 1
      %p79 = scmp.eq.s32.totalorder %s18, 1
      %p80 = scmp.ne.s32.totalorder %s75, %s77
      %p81 = scmp.eq.s32.totalorder %s18, 0
      %p82 = por %p80, %p81
      %p83 = scmp.ne.s32.totalorder %s75, %s77
      %p84 = scmp.eq.s32.totalorder %s23, 1
      %p85 = por %p83, %p84
      %p86 = scmp.ne.s32.totalorder %s77, %s78
      %p87 = scmp.eq.s32.totalorder %s23, 0
      %p88 = por %p86, %p87
      %p89 = scmp.ne.s32.totalorder %s77, %s78
      %p90 = scmp.eq.s32.totalorder %s24, 1
      %p91 = por %p89, %p90
      %p93 = scmp.ne.s32.totalorder %s78, %s92
      %p94 = scmp.eq.s32.totalorder %s24, 0
      %p95 = por %p93, %p94
      %s96 = sadd.s32 %s26, %s27
      %s97 = sadd.s32 %s40, %s36
      %s98 = ssub.s32 %s25, %s44
      %s99 = ssub.s32 %s96, %s97
      %s100 = sor.u32 %s98, %s99
      %p101 = scmp.eq.s32.totalorder %s100, 0
      %s103 = sadd.s32 %s102, 1
      %s104 = scalar_select %p101, %s102, %s103
      %p107 = pneg %p101
      %p108 = scmp.eq.s32.totalorder %s18, 1
      %p109 = por %p107, %p108
      %p110 = scmp.ne.s32.totalorder %s102, %s105
      %p111 = scmp.eq.s32.totalorder %s18, 0
      %p112 = por %p110, %p111
      %p113 = scmp.ne.s32.totalorder %s102, %s105
      %p114 = scmp.eq.s32.totalorder %s23, 1
      %p115 = por %p113, %p114
      %p116 = scmp.ne.s32.totalorder %s105, %s106
      %p117 = scmp.eq.s32.totalorder %s23, 0
      %p118 = por %p116, %p117
      %p119 = scmp.ne.s32.totalorder %s105, %s106
      %p120 = scmp.eq.s32.totalorder %s24, 1
      %p121 = por %p119, %p120
      %p123 = scmp.ne.s32.totalorder %s106, %s122
      %p124 = scmp.eq.s32.totalorder %s24, 0
      %p125 = por %p123, %p124
      %s126 = ssub.s32 %s25, %s44
      %s127 = ssub.s32 %s26, %s40
      %s128 = sor.u32 %s126, %s127
      %p129 = scmp.eq.s32.totalorder %s128, 0
      %s131 = sadd.s32 %s130, 1
      %s132 = scalar_select %p129, %s130, %s131
      %p135 = pneg %p129
      %p136 = scmp.eq.s32.totalorder %s18, 1
      %p137 = por %p135, %p136
      %p138 = scmp.ne.s32.totalorder %s130, %s133
      %p139 = scmp.eq.s32.totalorder %s18, 0
      %p140 = por %p138, %p139
      %p141 = scmp.ne.s32.totalorder %s130, %s133
      %p142 = scmp.eq.s32.totalorder %s23, 1
      %p143 = por %p141, %p142
      %p144 = scmp.ne.s32.totalorder %s133, %s134
      %p145 = scmp.eq.s32.totalorder %s23, 0
      %p146 = por %p144, %p145
      %p147 = scmp.ne.s32.totalorder %s133, %s134
      %p148 = scmp.eq.s32.totalorder %s24, 1
      %p149 = por %p147, %p148
      %p151 = scmp.ne.s32.totalorder %s134, %s150
      %p152 = scmp.eq.s32.totalorder %s24, 0
      %p153 = por %p151, %p152
      %s154 = ssub.s32 %s25, %s44
      %s155 = ssub.s32 %s26, %s40
      %s156 = sor.u32 %s154, %s155
      %p157 = scmp.eq.s32.totalorder %s156, 0
      %s159 = sadd.s32 %s158, 1
      %s160 = scalar_select %p157, %s158, %s159
      %p163 = pneg %p157
      %p164 = scmp.eq.s32.totalorder %s18, 1
      %p165 = por %p163, %p164
      %p166 = scmp.ne.s32.totalorder %s158, %s161
      %p167 = scmp.eq.s32.totalorder %s18, 0
      %p168 = por %p166, %p167
      %p169 = scmp.ne.s32.totalorder %s158, %s161
      %p170 = scmp.eq.s32.totalorder %s23, 1
      %p171 = por %p169, %p170
      %p172 = scmp.ne.s32.totalorder %s161, %s162
      %p173 = scmp.eq.s32.totalorder %s23, 0
      %p174 = por %p172, %p173
      %p175 = scmp.ne.s32.totalorder %s161, %s162
      %p176 = scmp.eq.s32.totalorder %s24, 1
      %p177 = por %p175, %p176
      %p179 = scmp.ne.s32.totalorder %s162, %s178
      %p180 = scmp.eq.s32.totalorder %s24, 0
      %p181 = por %p179, %p180
      %p182 = scmp.le.s32.totalorder 1, %s18
      %p183 = scmp.lt.s32.totalorder %s18, 3
      %p184 = pnand %p182, %p183
      %p185 = pneg %p184
      // Predicated region
      $region9: #{tpu_custom_call.1} parent=5 // pred_check
        _
      $region10: #{tpu_custom_call.1} parent=5 // pred_check_branch
        %187 = sbr.rel (%p184) target = $region12
      $region11: #{tpu_custom_call.1} parent=5 // pred_region
        %s188 = ssub.s32 %s18, 1
        // Predicated region
        $region13: #{tpu_custom_call.1} parent=11 // pred_check
          %p189 = pneg %p88
        $region14: #{tpu_custom_call.1} parent=11 // pred_check_branch
          %191 = sbr.rel (%p189) target = $region16
        $region15: #{tpu_custom_call.1} parent=11 // pred_region
          %193 = vsyncadd [#allocation6], 0
          %s195 = sshll.u32 %s1, 4
          %s196 = int_to_ptr.hbm [resolvable:$true] %s195
          %s197 = sshll.u32 [#allocation5], 4
          %s198 = int_to_ptr.vmem [resolvable:$true] %s197
          %200 = dma.hbm_to_vmem [thread:$0]  %s196, 128, %s198, [#allocation6]
        $region16: #{tpu_custom_call.1} parent=11 // pred_fallthru
          _
      $region12: #{tpu_custom_call.1} parent=5 // pred_fallthru
        _
      %p201 = scmp.lt.s32.totalorder %s18, 2
      // Predicated region
      $region17: #{tpu_custom_call.1} parent=5 // pred_check
        %p202 = pneg %p201
      $region18: #{tpu_custom_call.1} parent=5 // pred_check_branch
        %204 = sbr.rel (%p202) target = $region20
      $region19: #{tpu_custom_call.1} parent=5 // pred_region
        // Predicated region
        $region21: #{tpu_custom_call.1} parent=19 // pred_check
          %p205 = pneg %p61
        $region22: #{tpu_custom_call.1} parent=19 // pred_check_branch
          %207 = sbr.rel (%p205) target = $region24
        $region23: #{tpu_custom_call.1} parent=19 // pred_region
          %s208 = sand.u32 %s51, 1
          %s209 = scalar_lea.sflag [#allocation3], %s208
          %s210 = sand.u32 %s51, 1
          %s211 = smul.addr %s210, 16
          %s212 = scalar_lea.vmem [#allocation2], %s211
          %s213 = sadd.s32 %s26, %s27
          %215 = vsyncadd %s209, 0
          %s216 = smul.addr %s25, 2
          %s217 = sadd.s32 %s213, %s216
          %s218 = smul.addr %s217, 8
          %s219 = scalar_lea.hbm %s0, %s218
          %s220 = sshll.u32 %s219, 4
          %s221 = int_to_ptr.hbm [resolvable:$true] %s220
          %s222 = sshll.u32 %s212, 4
          %s223 = int_to_ptr.vmem [resolvable:$true] %s222
          %228 = dma.hbm_to_vmem [thread:$0]  %s221, 256, %s223, %s209, 128, 128, 8
        $region24: #{tpu_custom_call.1} parent=19 // pred_fallthru
          _
      $region20: #{tpu_custom_call.1} parent=5 // pred_fallthru
        _
      %p229 = scmp.le.s32.totalorder 1, %s18
      %p230 = scmp.lt.s32.totalorder %s18, 3
      %p231 = pnand %p229, %p230
      %p232 = pneg %p231
      // Predicated region
      $region25: #{tpu_custom_call.1} parent=5 // pred_check
        _
      $region26: #{tpu_custom_call.1} parent=5 // pred_check_branch
        %234 = sbr.rel (%p231) target = $region28
      $region27: #{tpu_custom_call.1} parent=5 // pred_region
        %s235 = ssub.s32 %s18, 1
        %s236 = sand.u32 %s54, 1
        %s237 = scalar_lea.sflag [#allocation3], %s236
        %s238 = sand.u32 %s54, 1
        %s239 = smul.addr %s238, 16
        %s240 = scalar_lea.vmem [#allocation2], %s239
        // Predicated region
        $region29: #{tpu_custom_call.1} parent=27 // pred_check
          %p241 = pneg %p67
        $region30: #{tpu_custom_call.1} parent=27 // pred_check_branch
          %243 = sbr.rel (%p241) target = $region32
        $region31: #{tpu_custom_call.1} parent=27 // pred_region
          %245 = dma.done %s237, 256
        $region32: #{tpu_custom_call.1} parent=27 // pred_fallthru
          _
        // Predicated region
        $region33: #{tpu_custom_call.1} parent=27 // pred_check
          %p246 = pneg %p88
        $region34: #{tpu_custom_call.1} parent=27 // pred_check_branch
          %248 = sbr.rel (%p246) target = $region36
        $region35: #{tpu_custom_call.1} parent=27 // pred_region
          %250 = dma.done [#allocation6], 128
        $region36: #{tpu_custom_call.1} parent=27 // pred_fallthru
          _
        %s251 = sand.u32 %s54, 1
        %s252 = scalar_lea.sflag [#allocation3], %s251
        %s253 = sand.u32 %s54, 1
        %s254 = smul.addr %s253, 16
        %s255 = scalar_lea.vmem [#allocation2], %s254
        %p256 = pneg %p67
        %p257 = pneg %p64
        %p258 = pneg %p88
        %p259 = pneg %p85
        %p260 = pneg %p118
        %p261 = pneg %p115
        %s262 = sand.u32 %s105, 1
        %s263 = scalar_lea.sflag [#allocation4], %s262
        %s264 = sand.u32 %s105, 1
        %s265 = smul.addr %s264, 4
        %s266 = scalar_lea.vmem [#allocation7], %s265
        %p267 = pneg %p146
        %p268 = pneg %p143
        %p269 = scmp.lt.s32.totalorder %s28, 1
        %s270 = scalar_select %p269, %s28, 1
        %p271 = scmp.lt.s32.totalorder %s29, 0
        %s272 = scalar_select %p271, %s29, 0
        %s273 = sadd.s32 %s272, %s270
        %s274 = smul.addr %s273, 8
        %s275 = scalar_lea.vmem %s3, %s274
        %p276 = pneg %p174
        %p277 = pneg %p171
        %p278 = scmp.lt.s32.totalorder %s28, 1
        %s279 = scalar_select %p278, %s28, 1
        %p280 = scmp.lt.s32.totalorder %s29, 0
        %s281 = scalar_select %p280, %s29, 0
        %s282 = sadd.s32 %s281, %s279
        %s283 = smul.addr %s282, 8
        %s284 = scalar_lea.vmem %s4, %s283
        %s285 = sadd.s32 %s29, %s30
        %s286 = sadd.s32 %s29, %s30
        %p287 = scmp.lt.s32.totalorder %s28, 1
        %s288 = scalar_select %p287, %s28, 1
        %p289 = scmp.lt.s32.totalorder %s29, 0
        %s290 = scalar_select %p289, %s29, 0
        %s291 = sadd.s32 %s290, %s288
        %s292 = smul.addr %s291, 8
        %s293 = scalar_lea.vmem %s3, %s292
        %p294 = scmp.lt.s32.totalorder %s28, 1
        %s295 = scalar_select %p294, %s28, 1
        %p296 = scmp.lt.s32.totalorder %s29, 0
        %s297 = scalar_select %p296, %s29, 0
        %s298 = sadd.s32 %s297, %s295
        %s299 = smul.addr %s298, 8
        %s300 = scalar_lea.vmem %s4, %s299
        %p301 = scmp.eq.s32.totalorder %s30, 0
        // Predicated region
        $region37: #{tpu_custom_call.1} parent=27 // pred_check
          %p302 = pneg %p301
        $region38: #{tpu_custom_call.1} parent=27 // pred_check_branch
          %304 = sbr.rel (%p302) target = $region40
        $region39: #{tpu_custom_call.1} parent=27 // pred_region
          %vm305 = vcmask 7168
          %306 = vst.msk [vmem:[%s293] sm:$0xff] %vm305, 0.0
          %307 = vst.msk [vmem:[%s300] sm:$0xff] %vm305, 0.0
        $region40: #{tpu_custom_call.1} parent=27 // pred_fallthru
          _
        %v308 = vld [vmem:[#allocation5] sm:$0xff]
        %v309 = vld [vmem:[%s240] sm:$0xff]
        %v310 = vld [vmem:[%s240 + $0x8] sm:$0xff]
        %vm311 = vcmask 130048
        %v313 = vsel %vm311, %v308, 0
        %315 = vmatpush.msra.mxu0 0.0
        %316 = vmatpush.msra.mxu0 0.0
        %317 = vmatpush.msra.mxu0 0.0
        %318 = vmatpush.msra.mxu0 0.0
        %319 = vmatpush.msra.mxu0 0.0
        %320 = vmatpush.msra.mxu0 0.0
        %321 = vmatpush.msra.mxu0 0.0
        %322 = vmatpush.msra.mxu0 0.0
        %323 = vmatpush.msra.mxu0 0.0
        %324 = vmatpush.msra.mxu0 0.0
        %325 = vmatpush.msra.mxu0 0.0
        %326 = vmatpush.msra.mxu0 0.0
        %327 = vmatpush.msra.mxu0 0.0
        %328 = vmatpush.msra.mxu0 0.0
        %329 = vmatpush.msra.mxu0 %v310
        %330 = vmatpush.msra.mxu0 %v309
        %331 = vmatmul.f32.gmra.mxu0 %v313
        %v332 = vpop.f32.mrf.mxu0
        %v333 = vadd.f32 0.0, %v332
        %334 = vdwg.mxu0
        %v335 = vpack.c.bf16 %v333, %v333
        %vm336 = vcmask 519168
        %337 = vst.msk [vmem:[%s266] sm:$0xf] %vm336, %v335
        %v338 = vld [vmem:[%s293] sm:$0xff]
        %vm339 = vcmask 523264
        %v340 = vsel %vm339, %v333, 0.0
        %341 = vadd.xlane.f32.xlu0 %v340
        %v342 = vpop.xlane.xlu0 %341
        %v343 = vadd.f32 %v338, %v342
        %vm344 = vcmask 7168
        %345 = vst.msk [vmem:[%s293] sm:$0xff] %vm344, %v343
        %v346 = vld [vmem:[%s300] sm:$0xff]
        %v347 = vmul.f32 %v333, %v333
        %v348 = vsel %vm339, %v347, 0.0
        %349 = vadd.xlane.f32.xlu0 %v348
        %v350 = vpop.xlane.xlu0 %349
        %v351 = vadd.f32 %v346, %v350
        %352 = vst.msk [vmem:[%s300] sm:$0xff] %vm344, %v351
        %s353 = sand.u32 %s105, 1
        %s354 = scalar_lea.sflag [#allocation4], %s353
        %s355 = sand.u32 %s105, 1
        %s356 = smul.addr %s355, 4
        %s357 = scalar_lea.vmem [#allocation7], %s356
        %p358 = scmp.lt.s32.totalorder %s28, 1
        %s359 = scalar_select %p358, %s28, 1
        %p360 = scmp.lt.s32.totalorder %s29, 0
        %s361 = scalar_select %p360, %s29, 0
        %s362 = sadd.s32 %s361, %s359
        %s363 = smul.addr %s362, 8
        %s364 = scalar_lea.vmem %s3, %s363
        %p365 = scmp.lt.s32.totalorder %s28, 1
        %s366 = scalar_select %p365, %s28, 1
        %p367 = scmp.lt.s32.totalorder %s29, 0
        %s368 = scalar_select %p367, %s29, 0
        %s369 = sadd.s32 %s368, %s366
        %s370 = smul.addr %s369, 8
        %s371 = scalar_lea.vmem %s4, %s370
        // Predicated region
        $region41: #{tpu_custom_call.1} parent=27 // pred_check
          %p372 = pneg %p115
        $region42: #{tpu_custom_call.1} parent=27 // pred_check_branch
          %374 = sbr.rel (%p372) target = $region44
        $region43: #{tpu_custom_call.1} parent=27 // pred_region
          %s375 = sadd.s32 %s29, %s30
          %377 = vsyncadd %s354, 0
          %s378 = sadd.s32 %s375, %s28
          %s379 = smul.addr %s378, 4
          %s380 = scalar_lea.hbm %s2, %s379
          %s382 = sshll.u32 %s357, 4
          %s383 = int_to_ptr.vmem [resolvable:$true] %s382
          %s384 = sshll.u32 %s380, 4
          %s385 = int_to_ptr.hbm [resolvable:$true] %s384
          %387 = dma.vmem_to_hbm [thread:$0]  %s383, 64, %s385, %s354
        $region44: #{tpu_custom_call.1} parent=27 // pred_fallthru
          _
        // Predicated region
        $region45: #{tpu_custom_call.1} parent=27 // pred_check
          %p388 = pneg %p143
        $region46: #{tpu_custom_call.1} parent=27 // pred_check_branch
          %390 = sbr.rel (%p388) target = $region48
        $region47: #{tpu_custom_call.1} parent=27 // pred_region
          _
        $region48: #{tpu_custom_call.1} parent=27 // pred_fallthru
          _
        // Predicated region
        $region49: #{tpu_custom_call.1} parent=27 // pred_check
          %p391 = pneg %p171
        $region50: #{tpu_custom_call.1} parent=27 // pred_check_branch
          %393 = sbr.rel (%p391) target = $region52
        $region51: #{tpu_custom_call.1} parent=27 // pred_region
          _
        $region52: #{tpu_custom_call.1} parent=27 // pred_fallthru
          _
      $region28: #{tpu_custom_call.1} parent=5 // pred_fallthru
        _
      %p394 = scmp.le.s32.totalorder 2, %s18
      // Predicated region
      $region53: #{tpu_custom_call.1} parent=5 // pred_check
        %p395 = pneg %p394
      $region54: #{tpu_custom_call.1} parent=5 // pred_check_branch
        %397 = sbr.rel (%p395) target = $region56
      $region55: #{tpu_custom_call.1} parent=5 // pred_region
        %s398 = ssub.s32 %s18, 2
        // Predicated region
        $region57: #{tpu_custom_call.1} parent=55 // pred_check
          %p399 = pneg %p121
        $region58: #{tpu_custom_call.1} parent=55 // pred_check_branch
          %401 = sbr.rel (%p399) target = $region60
        $region59: #{tpu_custom_call.1} parent=55 // pred_region
          %s402 = sand.u32 %s106, 1
          %s403 = scalar_lea.sflag [#allocation4], %s402
          %s404 = sand.u32 %s106, 1
          %s405 = smul.addr %s404, 4
          %s406 = scalar_lea.vmem [#allocation7], %s405
          %408 = dma.done %s403, 64
        $region60: #{tpu_custom_call.1} parent=55 // pred_fallthru
          _
        // Predicated region
        $region61: #{tpu_custom_call.1} parent=55 // pred_check
          %p409 = pneg %p149
        $region62: #{tpu_custom_call.1} parent=55 // pred_check_branch
          %411 = sbr.rel (%p409) target = $region64
        $region63: #{tpu_custom_call.1} parent=55 // pred_region
          %p412 = scmp.lt.s32.totalorder %s31, 1
          %s413 = scalar_select %p412, %s31, 1
          %p414 = scmp.lt.s32.totalorder %s32, 0
          %s415 = scalar_select %p414, %s32, 0
          %s416 = sadd.s32 %s415, %s413
          %s417 = smul.addr %s416, 8
          %s418 = scalar_lea.vmem %s3, %s417
        $region64: #{tpu_custom_call.1} parent=55 // pred_fallthru
          _
        // Predicated region
        $region65: #{tpu_custom_call.1} parent=55 // pred_check
          %p419 = pneg %p177
        $region66: #{tpu_custom_call.1} parent=55 // pred_check_branch
          %421 = sbr.rel (%p419) target = $region68
        $region67: #{tpu_custom_call.1} parent=55 // pred_region
          %p422 = scmp.lt.s32.totalorder %s31, 1
          %s423 = scalar_select %p422, %s31, 1
          %p424 = scmp.lt.s32.totalorder %s32, 0
          %s425 = scalar_select %p424, %s32, 0
          %s426 = sadd.s32 %s425, %s423
          %s427 = smul.addr %s426, 8
          %s428 = scalar_lea.vmem %s4, %s427
        $region68: #{tpu_custom_call.1} parent=55 // pred_fallthru
          _
      $region56: #{tpu_custom_call.1} parent=5 // pred_fallthru
        _
    $region6: #{tpu_custom_call.1} parent=1 // loop_footer
      %s22 = sadd.s32 1, %s18
    $region7: #{tpu_custom_call.1} parent=1 // loop_footer_branch
      %17 = sbr.rel target = $region3
    $region8: #{tpu_custom_call.1} parent=1 // loop_exit
      _
    %429 = vsyncpa [#allocation3], 1
    %s430 = scalar_lea.sflag [#allocation3], 1
    %431 = vsyncpa %s430, 1
    %432 = vsyncpa [#allocation6], 1
    %433 = vsyncpa [#allocation4], 1
    %s434 = scalar_lea.sflag [#allocation4], 1
    %435 = vsyncpa %s434, 1

</llo_original>
